<compile_context>
chip_gen: v5e
topology: v5e:2x2
jax: 0.10.0
libtpu: 0.0.40
codegen_flags: <defaults>
</compile_context>

<pallas_src>
import math

import jax
import jax.numpy as jnp
from jax.experimental import pallas as pl
from jax.experimental.pallas import tpu as pltpu


# ----------------------------------------------------------------------------
# Generation-aware VMEM budgets.
# ----------------------------------------------------------------------------
def _vmem_budgets():
    phys = 64 * 1024 * 1024                       # conservative default (v7x-sized)
    try:
        phys = int(pltpu.get_tpu_info().vmem_capacity_bytes)
    except Exception:
        pass
    tile_budget = max(8 * 1024 * 1024, phys // 3)             # working-set for tile sizing
    vmem_limit = min(int(phys * 0.75), 100 * 1024 * 1024)     # scoped-VMEM limit
    return tile_budget, vmem_limit


# ----------------------------------------------------------------------------
# Tile-size selection + padding decision.
#   Working set per spatial column (f32, double-buffered): 3 input frames + S outputs.
#   Returns (tile_hw, hw_pad) with tile_hw a multiple of 128 (or full extent if HW<128)
#   and hw_pad a multiple of tile_hw (pad in the wrapper if hw_pad != HW).
# ----------------------------------------------------------------------------
def _select_tile_and_pad(hw, c, s, budget_bytes, batch=1, max_tile=16384):
    per_col = (3 * 2 + s * 2) * c * 4
    cap = max(128, min(max_tile, budget_bytes // per_col))
    cap = (cap // 128) * 128
    if hw < 128:
        return hw, hw                              # single full-extent block (legal)
    if hw <= cap and hw % 128 == 0:
        tile = hw
    else:
        tile = 0
        if hw % 128 == 0:
            t = min(cap, hw)
            t = (t // 128) * 128
            while t >= 128:                        # largest multiple-of-128 divisor <= cap
                if hw % t == 0:
                    tile = t
                    break
                t -= 128
        if tile == 0:                              # no divisor -> pad to a lane-dense tile
            tile = min(cap, ((hw + 127) // 128) * 128)
    hw_pad = ((hw + tile - 1) // tile) * tile
    # v7x megacore: keep >= 2 parallel grid points so both TensorCores get work.
    if batch * (hw_pad // tile) < 2 and tile % 256 == 0:
        tile //= 2
        hw_pad = ((hw + tile - 1) // tile) * tile
    return tile, hw_pad


# ----------------------------------------------------------------------------
# Fused-stage enhance kernel (S folded into the body).
#   grid = (B, HW // TILE)
#   diff = |pre - post|                      (computed once per tile)
#   feat_s = ReLU(W_s @ diff)                (1x1 conv == channel matmul)
#   acc = middle ; acc += feat_s per stage ; out[s] = acc
# ----------------------------------------------------------------------------
def _make_fused_enhance_kernel(S, C, use_mxu):
    def kernel(pre_ref, post_ref, mid_ref, w_ref, out_ref):
        diff = jnp.abs(pre_ref[0, 0] - post_ref[0, 0]).astype(jnp.float32)   # [C, TILE]
        acc = mid_ref[0, 0].astype(jnp.float32)                              # [C, TILE]

        if use_mxu:
            # Single wide matmul: pre-stacked/pre-cast [S*C, C] bf16 weights against the
            # bf16 diff, f32 accumulation.  Fills the 256-wide MXU in one pass instead of
            # S narrow pushes; kernel stays HBM-bound so bf16 operands are full rate.
            diff_bf = diff.astype(jnp.bfloat16)
            feat_all = jnp.dot(w_ref[...], diff_bf,
                               preferred_element_type=jnp.float32)            # [S*C, TILE]
            feat_all = jnp.maximum(feat_all, 0.0)
            for s in range(S):
                acc = acc + feat_all[s * C:(s + 1) * C, :]
                out_ref[s, 0] = acc.astype(out_ref.dtype)
        else:
            # Tiny channel counts (e.g. C=3): an MXU matmul would be >95% padding waste,
            # so do the 1x1 conv as an unrolled chain of broadcast multiply-adds (VPU).
            for s in range(S):
                w = w_ref[s]                                                  # [C, C] f32
                feat = w[:, 0:1] * diff[0:1, :]
                for c in range(1, C):
                    feat = feat + w[:, c:c + 1] * diff[c:c + 1, :]
                acc = acc + jnp.maximum(feat, 0.0)
                out_ref[s, 0] = acc.astype(out_ref.dtype)

    return kernel


def fused_enhance(frames_flat, w_stacked, num_perception_frame):
    """frames_flat: [T, B, C, HW] f32 video tensor; w_stacked: [S, C, C] 1x1-conv weights.

    Returns the per-stage enhanced middle frames, shape [S, B, C, HW]:
        out[s] = middle + sum_{j<=s} ReLU(W_j @ |pre - post|)
    """
    T, B, C, HW = frames_flat.shape
    S = w_stacked.shape[0]
    middle_idx = T // 2
    post_idx = num_perception_frame + 1

    tile_budget, vmem_limit = _vmem_budgets()
    tile_hw, hw_pad = _select_tile_and_pad(HW, C, S, tile_budget, batch=B)

    if hw_pad != HW:
        frames_flat = jnp.pad(
            frames_flat, ((0, 0), (0, 0), (0, 0), (0, hw_pad - HW)))

    n_hw = hw_pad // tile_hw
    grid = (B, n_hw)

    use_mxu = C > 8
    if use_mxu:
        # Pre-stack + pre-cast once in the wrapper; resident in VMEM for the whole grid.
        w_in = w_stacked.astype(jnp.bfloat16).reshape(S * C, C)
        w_spec = pl.BlockSpec((S * C, C), lambda b, h: (0, 0))
    else:
        w_in = w_stacked
        w_spec = pl.BlockSpec((S, C, C), lambda b, h: (0, 0, 0))

    def frame_spec(t_idx):
        # DMA one (C, tile_hw) slab of frame t_idx straight out of the video tensor.
        return pl.BlockSpec((1, 1, C, tile_hw), lambda b, h, t=t_idx: (t, b, 0, h))

    out_spec = pl.BlockSpec((S, 1, C, tile_hw), lambda b, h: (0, b, 0, h))

    cost = pl.CostEstimate(
        flops=2 * S * B * C * C * hw_pad,
        transcendentals=0,
        bytes_accessed=4 * (3 * B * C * hw_pad + S * B * C * hw_pad) + w_in.size * w_in.dtype.itemsize,
    )

    out = pl.pallas_call(
        _make_fused_enhance_kernel(S, C, use_mxu),
        out_shape=jax.ShapeDtypeStruct((S, B, C, hw_pad), frames_flat.dtype),
        grid=grid,
        in_specs=[frame_spec(0), frame_spec(post_idx), frame_spec(middle_idx), w_spec],
        out_specs=out_spec,
        compiler_params=pltpu.CompilerParams(
            dimension_semantics=("parallel", "parallel"),
            vmem_limit_bytes=vmem_limit,
        ),
        cost_estimate=cost,
    )(frames_flat, frames_flat, frames_flat, w_in)

    if hw_pad != HW:
        out = out[..., :HW]
    return out


# ----------------------------------------------------------------------------
# Encoder (JAX/Pallas port of the PyTorch module)
# ----------------------------------------------------------------------------
class EncoderPallas:
    def __init__(self, key, num_perception_frame, in_height, in_width, embed_dims):
        self.num_perception_frame = num_perception_frame
        self.num_stages = len(embed_dims)
        # TODO(synk): the real X3D backbone changes channel counts per stage; the fused
        # enhance path stacks equal-sized 1x1-conv weights (valid with identity blocks).
        assert len(set(embed_dims)) == 1, "fused enhance requires equal embed_dims"
        keys = jax.random.split(key, 1 + len(embed_dims))
        # nn.Parameter(torch.randn(1, 3, num_perception_frame, in_height, in_width))
        self.perception_frames = jax.random.normal(
            keys[0], (1, 3, num_perception_frame, in_height, in_width), jnp.float32)
        # fc[i] = Conv2d(dim, dim, kernel_size=1, bias=False) -> stacked [S, dim, dim]
        self.fc_w = jnp.stack([
            jax.random.normal(keys[1 + i], (d, d), jnp.float32) / math.sqrt(d)
            for i, d in enumerate(embed_dims)
        ])

    def _x3d_block(self, x, i):
        # TODO(synk): pytorchvideo `create_x3d` backbone blocks (pretrained external
        # model) have no clean in-script Pallas equivalent; treated as identity here.
        return x

    def _build_frames(self, x, y):
        # Build the video tensor directly in [T, B, C, H, W] layout so the Pallas kernel
        # DMAs frames straight from HBM with lane-dense (C, H*W) tiles.
        B, C, H, W = x.shape
        percep = jnp.transpose(self.perception_frames, (2, 0, 1, 3, 4))   # [Tp, 1, 3, H, W]
        percep = jnp.broadcast_to(
            percep, (self.num_perception_frame, B, percep.shape[2], H, W))
        return jnp.concatenate([x[None], percep, y[None]], axis=0)        # [T, B, C, H, W]

    def base_forward(self, frames, output_final=False):
        T, B, C, H, W = frames.shape
        if output_final:
            x = frames
            for i in range(5):
                x = self._x3d_block(x, i)
            return x[self.num_perception_frame]                           # [B, C, H, W]

        middle_idx = T // 2
        frames_flat = frames.reshape(T, B, C, H * W)                      # free reshape
        x_stage = frames_flat
        for i in range(self.num_stages):
            x_stage = self._x3d_block(x_stage, i)                         # identity stand-in

        # With identity x3d blocks, only the middle frame changes across the 4
        # (block -> enhance) stages, so all 4 enhance steps are fused into a single
        # pallas_call; only the enhanced middle frames are written back.
        # TODO(synk): un-fuse and interleave with real X3D blocks.
        enhanced_mid = fused_enhance(x_stage, self.fc_w, self.num_perception_frame)

        out = []
        for i in range(self.num_stages):
            layer_feature = []
            for idx in range(self.num_perception_frame):
                t = idx + 1
                if t == middle_idx:
                    layer_feature.append(enhanced_mid[i].reshape(B, C, H, W))
                else:
                    layer_feature.append(frames[t])
            out.append(layer_feature)
        return out

    def forward(self, x, y, output_final=False):
        frames = self._build_frames(x, y)
        return self.base_forward(frames, output_final)


# ----------------------------------------------------------------------------
# Pure-JAX references (correctness checks)
# ----------------------------------------------------------------------------
def _fused_enhance_ref(frames_flat, w_stacked, num_perception_frame, use_bf16_matmul=False):
    T, B, C, HW = frames_flat.shape
    pre = frames_flat[0]
    post = frames_flat[num_perception_frame + 1]
    mid = frames_flat[T // 2]
    diff = jnp.abs(pre - post)
    acc = mid.astype(jnp.float32)
    outs = []
    for s in range(w_stacked.shape[0]):
        w = w_stacked[s]
        if use_bf16_matmul:
            feat = jnp.einsum('oc,bcn->bon', w.astype(jnp.bfloat16), diff.astype(jnp.bfloat16),
                              preferred_element_type=jnp.float32)
        else:
            feat = jnp.einsum('oc,bcn->bon', w, diff)
        acc = acc + jnp.maximum(feat, 0.0)
        outs.append(acc)
    return jnp.stack(outs, axis=0).astype(frames_flat.dtype)


def _forward_ref(enc, x, y):
    frames = enc._build_frames(x, y)
    T, B, C, H, W = frames.shape
    middle_idx = T // 2
    frames_flat = frames.reshape(T, B, C, H * W)
    enh = _fused_enhance_ref(frames_flat, enc.fc_w, enc.num_perception_frame)
    out = []
    for i in range(enc.fc_w.shape[0]):
        layer_feature = []
        for idx in range(enc.num_perception_frame):
            t = idx + 1
            layer_feature.append(enh[i].reshape(B, C, H, W) if t == middle_idx else frames[t])
        out.append(layer_feature)
    return out


if __name__ == "__main__":
    B, C, H, W = 2, 3, 16, 16
    num_perception_frame = 2
    embed_dims = [C] * 4    # identity x3d stand-ins keep the channel count at 3

    key = jax.random.PRNGKey(0)
    k_params, k_x, k_y, k_big = jax.random.split(key, 4)

    enc = EncoderPallas(k_params, num_perception_frame, H, W, embed_dims)
    x = jax.random.normal(k_x, (B, C, H, W), jnp.float32)
    y = jax.random.normal(k_y, (B, C, H, W), jnp.float32)

    features = enc.forward(x, y, output_final=False)
    features = jax.block_until_ready(features)

    # Sanity: 4 stages, each with `num_perception_frame` feature maps of [B, C, H, W]
    assert len(features) == 4
    assert all(len(stage) == num_perception_frame for stage in features)
    assert all(f.shape == (B, C, H, W) for stage in features for f in stage)

    # End-to-end correctness vs a pure-JAX reference (small-C VPU path, exact f32).
    ref_features = _forward_ref(enc, x, y)
    for stage_got, stage_ref in zip(features, ref_features):
        for fg, fr in zip(stage_got, stage_ref):
            assert jnp.allclose(fg, fr, atol=1e-5, rtol=1e-5), "enhance features mismatch"

    # output_final path
    final = jax.block_until_ready(enc.forward(x, y, output_final=True))
    assert final.shape == (B, C, H, W)

    # Exercise the large-C MXU path (stacked [S*C, C] bf16 matmul, f32 accumulation) and
    # HW tiling. Reference uses the same bf16 casts.
    Cb, Tb, Bb, HWb = 64, num_perception_frame + 2, 2, 8192
    kf, kw = jax.random.split(k_big)
    frames_big = jax.random.normal(kf, (Tb, Bb, Cb, HWb), jnp.float32)
    w_big = jax.random.normal(kw, (4, Cb, Cb), jnp.float32) / math.sqrt(Cb)
    got = jax.block_until_ready(fused_enhance(frames_big, w_big, num_perception_frame))
    want = _fused_enhance_ref(frames_big, w_big, num_perception_frame, use_bf16_matmul=True)
    assert jnp.allclose(got, want, atol=1e-3, rtol=1e-3), "MXU enhance path mismatch"

    # Exercise the padding path (HW not a multiple of 128).
    HWp = 300
    frames_pad = jax.random.normal(kf, (Tb, Bb, Cb, HWp), jnp.float32)
    got_p = jax.block_until_ready(fused_enhance(frames_pad, w_big, num_perception_frame))
    want_p = _fused_enhance_ref(frames_pad, w_big, num_perception_frame, use_bf16_matmul=True)
    assert got_p.shape == (4, Bb, Cb, HWp)
    assert jnp.allclose(got_p, want_p, atol=1e-3, rtol=1e-3), "padded enhance path mismatch"

    print("KERNEL_OK")
</pallas_src>

<mosaic_0001>
module attributes {stable_mosaic.version = 11 : i64} {
  func.func @kernel(%arg0: i32, %arg1: i32, %arg2: memref<1x1x3x256xf32, #tpu.memory_space<vmem>>, %arg3: memref<1x1x3x256xf32, #tpu.memory_space<vmem>>, %arg4: memref<1x1x3x256xf32, #tpu.memory_space<vmem>>, %arg5: memref<4x3x3xf32, #tpu.memory_space<vmem>>, %arg6: memref<4x1x3x256xf32, #tpu.memory_space<vmem>>) attributes {dimension_semantics = [#tpu.dimension_semantics<parallel>, #tpu.dimension_semantics<parallel>], iteration_bounds = array<i64: 2, 1>, scalar_prefetch = 0 : i64, scratch_operands = 0 : i64, tpu.core_type = #tpu.core_type<tc>, window_params = [{transform_indices = @transform_0, window_bounds = array<i64: 1, 1, 3, 256>}, {transform_indices = @transform_1, window_bounds = array<i64: 1, 1, 3, 256>}, {transform_indices = @transform_2, window_bounds = array<i64: 1, 1, 3, 256>}, {pipeline_mode = #tpu.pipeline_mode<synchronous>, transform_indices = @transform_3, window_bounds = array<i64: 4, 3, 3>}, {transform_indices = @transform_4, window_bounds = array<i64: 4, 1, 3, 256>}]} {
    %c0 = arith.constant 0 : index
    %c0_0 = arith.constant 0 : index
    %c0_1 = arith.constant 0 : index
    %c0_2 = arith.constant 0 : index
    %0 = vector.load %arg2[%c0, %c0_0, %c0_1, %c0_2] : memref<1x1x3x256xf32, #tpu.memory_space<vmem>>, vector<1x1x3x256xf32>
    %1 = vector.shape_cast %0 : vector<1x1x3x256xf32> to vector<3x256xf32>
    %c0_3 = arith.constant 0 : index
    %c0_4 = arith.constant 0 : index
    %c0_5 = arith.constant 0 : index
    %c0_6 = arith.constant 0 : index
    %2 = vector.load %arg3[%c0_3, %c0_4, %c0_5, %c0_6] : memref<1x1x3x256xf32, #tpu.memory_space<vmem>>, vector<1x1x3x256xf32>
    %3 = vector.shape_cast %2 : vector<1x1x3x256xf32> to vector<3x256xf32>
    %4 = arith.subf %1, %3 : vector<3x256xf32>
    %5 = math.absf %4 : vector<3x256xf32>
    %c0_7 = arith.constant 0 : index
    %c0_8 = arith.constant 0 : index
    %c0_9 = arith.constant 0 : index
    %c0_10 = arith.constant 0 : index
    %6 = vector.load %arg4[%c0_7, %c0_8, %c0_9, %c0_10] : memref<1x1x3x256xf32, #tpu.memory_space<vmem>>, vector<1x1x3x256xf32>
    %7 = vector.shape_cast %6 : vector<1x1x3x256xf32> to vector<3x256xf32>
    %c0_11 = arith.constant 0 : index
    %c0_12 = arith.constant 0 : index
    %c0_13 = arith.constant 0 : index
    %8 = vector.load %arg5[%c0_11, %c0_12, %c0_13] : memref<4x3x3xf32, #tpu.memory_space<vmem>>, vector<1x3x3xf32>
    %9 = vector.shape_cast %8 : vector<1x3x3xf32> to vector<3x3xf32>
    %10 = vector.extract_strided_slice %9 {offsets = [0, 0], sizes = [3, 1], strides = [1, 1]} : vector<3x3xf32> to vector<3x1xf32>
    %11 = vector.extract_strided_slice %5 {offsets = [0, 0], sizes = [1, 256], strides = [1, 1]} : vector<3x256xf32> to vector<1x256xf32>
    %12 = vector.broadcast %10 : vector<3x1xf32> to vector<3x256xf32>
    %13 = vector.broadcast %11 : vector<1x256xf32> to vector<3x256xf32>
    %14 = arith.mulf %12, %13 : vector<3x256xf32>
    %15 = vector.extract_strided_slice %9 {offsets = [0, 1], sizes = [3, 1], strides = [1, 1]} : vector<3x3xf32> to vector<3x1xf32>
    %16 = vector.extract_strided_slice %5 {offsets = [1, 0], sizes = [1, 256], strides = [1, 1]} : vector<3x256xf32> to vector<1x256xf32>
    %17 = vector.broadcast %15 : vector<3x1xf32> to vector<3x256xf32>
    %18 = vector.broadcast %16 : vector<1x256xf32> to vector<3x256xf32>
    %19 = arith.mulf %17, %18 : vector<3x256xf32>
    %20 = arith.addf %14, %19 : vector<3x256xf32>
    %21 = vector.extract_strided_slice %9 {offsets = [0, 2], sizes = [3, 1], strides = [1, 1]} : vector<3x3xf32> to vector<3x1xf32>
    %22 = vector.extract_strided_slice %5 {offsets = [2, 0], sizes = [1, 256], strides = [1, 1]} : vector<3x256xf32> to vector<1x256xf32>
    %23 = vector.broadcast %21 : vector<3x1xf32> to vector<3x256xf32>
    %24 = vector.broadcast %22 : vector<1x256xf32> to vector<3x256xf32>
    %25 = arith.mulf %23, %24 : vector<3x256xf32>
    %26 = arith.addf %20, %25 : vector<3x256xf32>
    %cst = arith.constant 0.000000e+00 : f32
    %27 = vector.broadcast %cst : f32 to vector<3x256xf32>
    %28 = arith.maximumf %26, %27 : vector<3x256xf32>
    %29 = arith.addf %7, %28 : vector<3x256xf32>
    %c0_14 = arith.constant 0 : index
    %c0_15 = arith.constant 0 : index
    %c0_16 = arith.constant 0 : index
    %c0_17 = arith.constant 0 : index
    %30 = vector.load %arg6[%c0_14, %c0_15, %c0_16, %c0_17] : memref<4x1x3x256xf32, #tpu.memory_space<vmem>>, vector<1x1x3x256xf32>
    %31 = vector.shape_cast %30 : vector<1x1x3x256xf32> to vector<3x256xf32>
    %32 = vector.shape_cast %29 : vector<3x256xf32> to vector<1x1x3x256xf32>
    tpu.vector_store %arg6[%c0_14, %c0_15, %c0_16, %c0_17], %32 {strides = array<i32>} : memref<4x1x3x256xf32, #tpu.memory_space<vmem>>, vector<1x1x3x256xf32>,
    %c1 = arith.constant 1 : index
    %c0_18 = arith.constant 0 : index
    %c0_19 = arith.constant 0 : index
    %33 = vector.load %arg5[%c1, %c0_18, %c0_19] : memref<4x3x3xf32, #tpu.memory_space<vmem>>, vector<1x3x3xf32>
    %34 = vector.shape_cast %33 : vector<1x3x3xf32> to vector<3x3xf32>
    %35 = vector.extract_strided_slice %34 {offsets = [0, 0], sizes = [3, 1], strides = [1, 1]} : vector<3x3xf32> to vector<3x1xf32>
    %36 = vector.extract_strided_slice %5 {offsets = [0, 0], sizes = [1, 256], strides = [1, 1]} : vector<3x256xf32> to vector<1x256xf32>
    %37 = vector.broadcast %35 : vector<3x1xf32> to vector<3x256xf32>
    %38 = vector.broadcast %36 : vector<1x256xf32> to vector<3x256xf32>
    %39 = arith.mulf %37, %38 : vector<3x256xf32>
    %40 = vector.extract_strided_slice %34 {offsets = [0, 1], sizes = [3, 1], strides = [1, 1]} : vector<3x3xf32> to vector<3x1xf32>
    %41 = vector.extract_strided_slice %5 {offsets = [1, 0], sizes = [1, 256], strides = [1, 1]} : vector<3x256xf32> to vector<1x256xf32>
    %42 = vector.broadcast %40 : vector<3x1xf32> to vector<3x256xf32>
    %43 = vector.broadcast %41 : vector<1x256xf32> to vector<3x256xf32>
    %44 = arith.mulf %42, %43 : vector<3x256xf32>
    %45 = arith.addf %39, %44 : vector<3x256xf32>
    %46 = vector.extract_strided_slice %34 {offsets = [0, 2], sizes = [3, 1], strides = [1, 1]} : vector<3x3xf32> to vector<3x1xf32>
    %47 = vector.extract_strided_slice %5 {offsets = [2, 0], sizes = [1, 256], strides = [1, 1]} : vector<3x256xf32> to vector<1x256xf32>
    %48 = vector.broadcast %46 : vector<3x1xf32> to vector<3x256xf32>
    %49 = vector.broadcast %47 : vector<1x256xf32> to vector<3x256xf32>
    %50 = arith.mulf %48, %49 : vector<3x256xf32>
    %51 = arith.addf %45, %50 : vector<3x256xf32>
    %cst_20 = arith.constant 0.000000e+00 : f32
    %52 = vector.broadcast %cst_20 : f32 to vector<3x256xf32>
    %53 = arith.maximumf %51, %52 : vector<3x256xf32>
    %54 = arith.addf %29, %53 : vector<3x256xf32>
    %c1_21 = arith.constant 1 : index
    %c0_22 = arith.constant 0 : index
    %c0_23 = arith.constant 0 : index
    %c0_24 = arith.constant 0 : index
    %55 = vector.load %arg6[%c1_21, %c0_22, %c0_23, %c0_24] : memref<4x1x3x256xf32, #tpu.memory_space<vmem>>, vector<1x1x3x256xf32>
    %56 = vector.shape_cast %55 : vector<1x1x3x256xf32> to vector<3x256xf32>
    %57 = vector.shape_cast %54 : vector<3x256xf32> to vector<1x1x3x256xf32>
    tpu.vector_store %arg6[%c1_21, %c0_22, %c0_23, %c0_24], %57 {strides = array<i32>} : memref<4x1x3x256xf32, #tpu.memory_space<vmem>>, vector<1x1x3x256xf32>,
    %c2 = arith.constant 2 : index
    %c0_25 = arith.constant 0 : index
    %c0_26 = arith.constant 0 : index
    %58 = vector.load %arg5[%c2, %c0_25, %c0_26] : memref<4x3x3xf32, #tpu.memory_space<vmem>>, vector<1x3x3xf32>
    %59 = vector.shape_cast %58 : vector<1x3x3xf32> to vector<3x3xf32>
    %60 = vector.extract_strided_slice %59 {offsets = [0, 0], sizes = [3, 1], strides = [1, 1]} : vector<3x3xf32> to vector<3x1xf32>
    %61 = vector.extract_strided_slice %5 {offsets = [0, 0], sizes = [1, 256], strides = [1, 1]} : vector<3x256xf32> to vector<1x256xf32>
    %62 = vector.broadcast %60 : vector<3x1xf32> to vector<3x256xf32>
    %63 = vector.broadcast %61 : vector<1x256xf32> to vector<3x256xf32>
    %64 = arith.mulf %62, %63 : vector<3x256xf32>
    %65 = vector.extract_strided_slice %59 {offsets = [0, 1], sizes = [3, 1], strides = [1, 1]} : vector<3x3xf32> to vector<3x1xf32>
    %66 = vector.extract_strided_slice %5 {offsets = [1, 0], sizes = [1, 256], strides = [1, 1]} : vector<3x256xf32> to vector<1x256xf32>
    %67 = vector.broadcast %65 : vector<3x1xf32> to vector<3x256xf32>
    %68 = vector.broadcast %66 : vector<1x256xf32> to vector<3x256xf32>
    %69 = arith.mulf %67, %68 : vector<3x256xf32>
    %70 = arith.addf %64, %69 : vector<3x256xf32>
    %71 = vector.extract_strided_slice %59 {offsets = [0, 2], sizes = [3, 1], strides = [1, 1]} : vector<3x3xf32> to vector<3x1xf32>
    %72 = vector.extract_strided_slice %5 {offsets = [2, 0], sizes = [1, 256], strides = [1, 1]} : vector<3x256xf32> to vector<1x256xf32>
    %73 = vector.broadcast %71 : vector<3x1xf32> to vector<3x256xf32>
    %74 = vector.broadcast %72 : vector<1x256xf32> to vector<3x256xf32>
    %75 = arith.mulf %73, %74 : vector<3x256xf32>
    %76 = arith.addf %70, %75 : vector<3x256xf32>
    %cst_27 = arith.constant 0.000000e+00 : f32
    %77 = vector.broadcast %cst_27 : f32 to vector<3x256xf32>
    %78 = arith.maximumf %76, %77 : vector<3x256xf32>
    %79 = arith.addf %54, %78 : vector<3x256xf32>
    %c2_28 = arith.constant 2 : index
    %c0_29 = arith.constant 0 : index
    %c0_30 = arith.constant 0 : index
    %c0_31 = arith.constant 0 : index
    %80 = vector.load %arg6[%c2_28, %c0_29, %c0_30, %c0_31] : memref<4x1x3x256xf32, #tpu.memory_space<vmem>>, vector<1x1x3x256xf32>
    %81 = vector.shape_cast %80 : vector<1x1x3x256xf32> to vector<3x256xf32>
    %82 = vector.shape_cast %79 : vector<3x256xf32> to vector<1x1x3x256xf32>
    tpu.vector_store %arg6[%c2_28, %c0_29, %c0_30, %c0_31], %82 {strides = array<i32>} : memref<4x1x3x256xf32, #tpu.memory_space<vmem>>, vector<1x1x3x256xf32>,
    %c3 = arith.constant 3 : index
    %c0_32 = arith.constant 0 : index
    %c0_33 = arith.constant 0 : index
    %83 = vector.load %arg5[%c3, %c0_32, %c0_33] : memref<4x3x3xf32, #tpu.memory_space<vmem>>, vector<1x3x3xf32>
    %84 = vector.shape_cast %83 : vector<1x3x3xf32> to vector<3x3xf32>
    %85 = vector.extract_strided_slice %84 {offsets = [0, 0], sizes = [3, 1], strides = [1, 1]} : vector<3x3xf32> to vector<3x1xf32>
    %86 = vector.extract_strided_slice %5 {offsets = [0, 0], sizes = [1, 256], strides = [1, 1]} : vector<3x256xf32> to vector<1x256xf32>
    %87 = vector.broadcast %85 : vector<3x1xf32> to vector<3x256xf32>
    %88 = vector.broadcast %86 : vector<1x256xf32> to vector<3x256xf32>
    %89 = arith.mulf %87, %88 : vector<3x256xf32>
    %90 = vector.extract_strided_slice %84 {offsets = [0, 1], sizes = [3, 1], strides = [1, 1]} : vector<3x3xf32> to vector<3x1xf32>
    %91 = vector.extract_strided_slice %5 {offsets = [1, 0], sizes = [1, 256], strides = [1, 1]} : vector<3x256xf32> to vector<1x256xf32>
    %92 = vector.broadcast %90 : vector<3x1xf32> to vector<3x256xf32>
    %93 = vector.broadcast %91 : vector<1x256xf32> to vector<3x256xf32>
    %94 = arith.mulf %92, %93 : vector<3x256xf32>
    %95 = arith.addf %89, %94 : vector<3x256xf32>
    %96 = vector.extract_strided_slice %84 {offsets = [0, 2], sizes = [3, 1], strides = [1, 1]} : vector<3x3xf32> to vector<3x1xf32>
    %97 = vector.extract_strided_slice %5 {offsets = [2, 0], sizes = [1, 256], strides = [1, 1]} : vector<3x256xf32> to vector<1x256xf32>
    %98 = vector.broadcast %96 : vector<3x1xf32> to vector<3x256xf32>
    %99 = vector.broadcast %97 : vector<1x256xf32> to vector<3x256xf32>
    %100 = arith.mulf %98, %99 : vector<3x256xf32>
    %101 = arith.addf %95, %100 : vector<3x256xf32>
    %cst_34 = arith.constant 0.000000e+00 : f32
    %102 = vector.broadcast %cst_34 : f32 to vector<3x256xf32>
    %103 = arith.maximumf %101, %102 : vector<3x256xf32>
    %104 = arith.addf %79, %103 : vector<3x256xf32>
    %c3_35 = arith.constant 3 : index
    %c0_36 = arith.constant 0 : index
    %c0_37 = arith.constant 0 : index
    %c0_38 = arith.constant 0 : index
    %105 = vector.load %arg6[%c3_35, %c0_36, %c0_37, %c0_38] : memref<4x1x3x256xf32, #tpu.memory_space<vmem>>, vector<1x1x3x256xf32>
    %106 = vector.shape_cast %105 : vector<1x1x3x256xf32> to vector<3x256xf32>
    %107 = vector.shape_cast %104 : vector<3x256xf32> to vector<1x1x3x256xf32>
    tpu.vector_store %arg6[%c3_35, %c0_36, %c0_37, %c0_38], %107 {strides = array<i32>} : memref<4x1x3x256xf32, #tpu.memory_space<vmem>>, vector<1x1x3x256xf32>,
    return
  }
  func.func @transform_0(%arg0: i32, %arg1: i32) -> (i32, i32, i32, i32) {
    %c0_i32 = arith.constant 0 : i32
    %c0_i32_0 = arith.constant 0 : i32
    %c0_i32_1 = arith.constant 0 : i32
    return %c0_i32, %arg0, %c0_i32_0, %arg1 : i32, i32, i32, i32
  }
  func.func @transform_1(%arg0: i32, %arg1: i32) -> (i32, i32, i32, i32) {
    %c3_i32 = arith.constant 3 : i32
    %c0_i32 = arith.constant 0 : i32
    %c0_i32_0 = arith.constant 0 : i32
    return %c3_i32, %arg0, %c0_i32, %arg1 : i32, i32, i32, i32
  }
  func.func @transform_2(%arg0: i32, %arg1: i32) -> (i32, i32, i32, i32) {
    %c2_i32 = arith.constant 2 : i32
    %c0_i32 = arith.constant 0 : i32
    %c0_i32_0 = arith.constant 0 : i32
    return %c2_i32, %arg0, %c0_i32, %arg1 : i32, i32, i32, i32
  }
  func.func @transform_3(%arg0: i32, %arg1: i32) -> (i32, i32, i32) {
    %c0_i32 = arith.constant 0 : i32
    %c0_i32_0 = arith.constant 0 : i32
    %c0_i32_1 = arith.constant 0 : i32
    %c0_i32_2 = arith.constant 0 : i32
    return %c0_i32, %c0_i32_0, %c0_i32_1 : i32, i32, i32
  }
  func.func @transform_4(%arg0: i32, %arg1: i32) -> (i32, i32, i32, i32) {
    %c0_i32 = arith.constant 0 : i32
    %c0_i32_0 = arith.constant 0 : i32
    %c0_i32_1 = arith.constant 0 : i32
    return %c0_i32, %arg0, %c0_i32_0, %arg1 : i32, i32, i32, i32
  }
}

</mosaic_0001>

<llo_original>
// kernel: tpu_custom_call.1
$region0: #{tpu_custom_call.1}
  #allocation0 [shape = 'u32[]', space=smem, size = 0x4, offset = 0x4, fixed_abs, tag = 'smem constant byte address 0x4 - core index']
  #allocation1 [shape = 'u32[72,128]{1,0:T(1,128)}', space=vmem, size = 0x9000, scoped, tag = 'internal scratch']
  %s0 = inlined_call_operand.vmem [shape: f32[4,2,3,256], index: 0, kind: input, shape index: {}]
  %s1 = inlined_call_operand.vmem [shape: f32[4,2,3,256], index: 1, kind: input, shape index: {}]
  %s2 = inlined_call_operand.vmem [shape: f32[4,2,3,256], index: 2, kind: input, shape index: {}]
  %s3 = inlined_call_operand.vmem [shape: f32[4,3,3], index: 3, kind: input, shape index: {}]
  %s4 = inlined_call_operand.vmem [shape: f32[4,2,3,256], index: 4, kind: output, shape index: {}]
  %s5 = sld [smem:[#allocation0]]
  $region83: #{tpu_custom_call.1} parent=0
    _
  %s7 = ssub.s32 1, %s5
  %s8 = scalar_select 0, %s7, %s5
  $region1: #{tpu_custom_call.1} parent=0
    #allocation2 [shape = 'u8[32768]{0}', space=vmem, size = 0x8000, scoped, tag = 'output window, operand 0']
    loop: start=0, step=1, limit=4
    $region2: #{tpu_custom_call.1} parent=1 // loop_pre_header
      _
    $region3: #{tpu_custom_call.1} parent=1 // loop_header
      %s10 = sphi 0, %s14
      %p11 = scmp.ge.s32.totalorder %s10, 4
      %s17 = sphi 0, %s29
      %s18 = sphi 0, %s25
      %s19 = sphi 0, %s17
      %s20 = sphi 0, %s18
      %s21 = sphi 0, %s19
      %s22 = sphi 0, %s20
      %s34 = sphi 0, %s36
      %s37 = sphi 0, %s34
      %s38 = sphi 0, %s37
      %s54 = sphi 0, %s38
      %s62 = sphi 0, %s64
      %s65 = sphi 0, %s62
      %s66 = sphi 0, %s65
      %s82 = sphi 0, %s66
      %s90 = sphi 0, %s92
      %s93 = sphi 0, %s90
      %s94 = sphi 0, %s93
      %s110 = sphi 0, %s94
      %s114 = sphi 0, %s114
      %s116 = sphi 0, %s114
      %s117 = sphi 0, %s116
      %s131 = sphi 0, %s117
      %s139 = sphi 0, %s141
      %s142 = sphi 0, %s139
      %s143 = sphi 0, %s142
      %s159 = sphi 0, %s143
    $region4: #{tpu_custom_call.1} parent=1 // loop_header_branch
      %13 = sbr.rel (%p11) target = $region8
    $region5: #{tpu_custom_call.1} parent=1 // loop_body
      %s15 = ssub.s32 %s10, 1
      %s16 = ssub.s32 %s10, 2
      %s23 = sadd.s32 1, %s18
      %p24 = scmp.ge.s32.totalorder %s23, 1
      %s25 = scalar_select %p24, 0, %s23
      %s26 = sadd.s32 1, %s17
      %s27 = scalar_select %p24, %s26, %s17
      %p28 = scmp.ge.s32.totalorder %s27, 2
      %s29 = scalar_select %p28, 0, %s27
      %s30 = ssub.s32 %s17, %s29
      %s31 = ssub.s32 %s18, %s25
      %s32 = sor.u32 %s30, %s31
      %p33 = scmp.eq.s32.totalorder %s32, 0
      %s35 = sadd.s32 %s34, 1
      %s36 = scalar_select %p33, %s34, %s35
      %p39 = pneg %p33
      %p40 = scmp.eq.s32.totalorder %s10, 1
      %p41 = por %p39, %p40
      %p42 = scmp.ne.s32.totalorder %s34, %s37
      %p43 = scmp.eq.s32.totalorder %s10, 0
      %p44 = por %p42, %p43
      %p45 = scmp.ne.s32.totalorder %s34, %s37
      %p46 = scmp.eq.s32.totalorder %s15, 1
      %p47 = por %p45, %p46
      %p48 = scmp.ne.s32.totalorder %s37, %s38
      %p49 = scmp.eq.s32.totalorder %s15, 0
      %p50 = por %p48, %p49
      %p51 = scmp.ne.s32.totalorder %s37, %s38
      %p52 = scmp.eq.s32.totalorder %s16, 1
      %p53 = por %p51, %p52
      %p55 = scmp.ne.s32.totalorder %s38, %s54
      %p56 = scmp.eq.s32.totalorder %s16, 0
      %p57 = por %p55, %p56
      %s58 = ssub.s32 %s17, %s29
      %s59 = ssub.s32 %s18, %s25
      %s60 = sor.u32 %s58, %s59
      %p61 = scmp.eq.s32.totalorder %s60, 0
      %s63 = sadd.s32 %s62, 1
      %s64 = scalar_select %p61, %s62, %s63
      %p67 = pneg %p61
      %p68 = scmp.eq.s32.totalorder %s10, 1
      %p69 = por %p67, %p68
      %p70 = scmp.ne.s32.totalorder %s62, %s65
      %p71 = scmp.eq.s32.totalorder %s10, 0
      %p72 = por %p70, %p71
      %p73 = scmp.ne.s32.totalorder %s62, %s65
      %p74 = scmp.eq.s32.totalorder %s15, 1
      %p75 = por %p73, %p74
      %p76 = scmp.ne.s32.totalorder %s65, %s66
      %p77 = scmp.eq.s32.totalorder %s15, 0
      %p78 = por %p76, %p77
      %p79 = scmp.ne.s32.totalorder %s65, %s66
      %p80 = scmp.eq.s32.totalorder %s16, 1
      %p81 = por %p79, %p80
      %p83 = scmp.ne.s32.totalorder %s66, %s82
      %p84 = scmp.eq.s32.totalorder %s16, 0
      %p85 = por %p83, %p84
      %s86 = ssub.s32 %s17, %s29
      %s87 = ssub.s32 %s18, %s25
      %s88 = sor.u32 %s86, %s87
      %p89 = scmp.eq.s32.totalorder %s88, 0
      %s91 = sadd.s32 %s90, 1
      %s92 = scalar_select %p89, %s90, %s91
      %p95 = pneg %p89
      %p96 = scmp.eq.s32.totalorder %s10, 1
      %p97 = por %p95, %p96
      %p98 = scmp.ne.s32.totalorder %s90, %s93
      %p99 = scmp.eq.s32.totalorder %s10, 0
      %p100 = por %p98, %p99
      %p101 = scmp.ne.s32.totalorder %s90, %s93
      %p102 = scmp.eq.s32.totalorder %s15, 1
      %p103 = por %p101, %p102
      %p104 = scmp.ne.s32.totalorder %s93, %s94
      %p105 = scmp.eq.s32.totalorder %s15, 0
      %p106 = por %p104, %p105
      %p107 = scmp.ne.s32.totalorder %s93, %s94
      %p108 = scmp.eq.s32.totalorder %s16, 1
      %p109 = por %p107, %p108
      %p111 = scmp.ne.s32.totalorder %s94, %s110
      %p112 = scmp.eq.s32.totalorder %s16, 0
      %p113 = por %p111, %p112
      %s115 = sadd.s32 %s114, 1
      %p118 = scmp.eq.s32.totalorder %s10, 1
      %p119 = scmp.ne.s32.totalorder %s114, %s116
      %p120 = scmp.eq.s32.totalorder %s10, 0
      %p121 = por %p119, %p120
      %p122 = scmp.ne.s32.totalorder %s114, %s116
      %p123 = scmp.eq.s32.totalorder %s15, 1
      %p124 = por %p122, %p123
      %p125 = scmp.ne.s32.totalorder %s116, %s117
      %p126 = scmp.eq.s32.totalorder %s15, 0
      %p127 = por %p125, %p126
      %p128 = scmp.ne.s32.totalorder %s116, %s117
      %p129 = scmp.eq.s32.totalorder %s16, 1
      %p130 = por %p128, %p129
      %p132 = scmp.ne.s32.totalorder %s117, %s131
      %p133 = scmp.eq.s32.totalorder %s16, 0
      %p134 = por %p132, %p133
      %s135 = ssub.s32 %s17, %s29
      %s136 = ssub.s32 %s18, %s25
      %s137 = sor.u32 %s135, %s136
      %p138 = scmp.eq.s32.totalorder %s137, 0
      %s140 = sadd.s32 %s139, 1
      %s141 = scalar_select %p138, %s139, %s140
      %p144 = pneg %p138
      %p145 = scmp.eq.s32.totalorder %s10, 1
      %p146 = por %p144, %p145
      %p147 = scmp.ne.s32.totalorder %s139, %s142
      %p148 = scmp.eq.s32.totalorder %s10, 0
      %p149 = por %p147, %p148
      %p150 = scmp.ne.s32.totalorder %s139, %s142
      %p151 = scmp.eq.s32.totalorder %s15, 1
      %p152 = por %p150, %p151
      %p153 = scmp.ne.s32.totalorder %s142, %s143
      %p154 = scmp.eq.s32.totalorder %s15, 0
      %p155 = por %p153, %p154
      %p156 = scmp.ne.s32.totalorder %s142, %s143
      %p157 = scmp.eq.s32.totalorder %s16, 1
      %p158 = por %p156, %p157
      %p160 = scmp.ne.s32.totalorder %s143, %s159
      %p161 = scmp.eq.s32.totalorder %s16, 0
      %p162 = por %p160, %p161
      %p163 = scmp.le.s32.totalorder 1, %s10
      %p164 = scmp.lt.s32.totalorder %s10, 3
      %p165 = pnand %p163, %p164
      %p166 = pneg %p165
      // Predicated region
      $region9: #{tpu_custom_call.1} parent=5 // pred_check
        _
      $region10: #{tpu_custom_call.1} parent=5 // pred_check_branch
        %168 = sbr.rel (%p165) target = $region12
      $region11: #{tpu_custom_call.1} parent=5 // pred_region
        %s169 = ssub.s32 %s10, 1
        // Predicated region
        $region13: #{tpu_custom_call.1} parent=11 // pred_check
          %p170 = pneg %p127
        $region14: #{tpu_custom_call.1} parent=11 // pred_check_branch
          %172 = sbr.rel (%p170) target = $region16
        $region15: #{tpu_custom_call.1} parent=11 // pred_region
          _
        $region16: #{tpu_custom_call.1} parent=11 // pred_fallthru
          _
      $region12: #{tpu_custom_call.1} parent=5 // pred_fallthru
        _
      %p173 = scmp.lt.s32.totalorder %s10, 2
      // Predicated region
      $region17: #{tpu_custom_call.1} parent=5 // pred_check
        %p174 = pneg %p173
      $region18: #{tpu_custom_call.1} parent=5 // pred_check_branch
        %176 = sbr.rel (%p174) target = $region20
      $region19: #{tpu_custom_call.1} parent=5 // pred_region
        // Predicated region
        $region21: #{tpu_custom_call.1} parent=19 // pred_check
          %p177 = pneg %p44
        $region22: #{tpu_custom_call.1} parent=19 // pred_check_branch
          %179 = sbr.rel (%p177) target = $region24
        $region23: #{tpu_custom_call.1} parent=19 // pred_region
          %s180 = smul.u32 2, %s18
          %p181 = scmp.lt.s32.totalorder %s17, 1
          %s182 = scalar_select %p181, %s17, 1
          %p183 = scmp.lt.s32.totalorder %s180, 1
          %s184 = scalar_select %p183, %s180, 1
          %s185 = smul.addr %s182, 2
          %s186 = sadd.s32 %s184, %s185
          %s187 = smul.addr %s186, 4
          %s188 = scalar_lea.vmem %s0, %s187
          %s189 = smul.u32 2, %s18
        $region24: #{tpu_custom_call.1} parent=19 // pred_fallthru
          _
        // Predicated region
        $region25: #{tpu_custom_call.1} parent=19 // pred_check
          %p190 = pneg %p72
        $region26: #{tpu_custom_call.1} parent=19 // pred_check_branch
          %192 = sbr.rel (%p190) target = $region28
        $region27: #{tpu_custom_call.1} parent=19 // pred_region
          %s193 = smul.u32 2, %s18
          %p194 = scmp.lt.s32.totalorder %s17, 1
          %s195 = scalar_select %p194, %s17, 1
          %p196 = scmp.lt.s32.totalorder %s193, 1
          %s197 = scalar_select %p196, %s193, 1
          %s198 = smul.addr %s195, 2
          %s199 = sadd.s32 %s197, %s198
          %s200 = sadd.s32 %s199, 12
          %s201 = smul.addr %s200, 4
          %s202 = scalar_lea.vmem %s1, %s201
          %s203 = smul.u32 2, %s18
        $region28: #{tpu_custom_call.1} parent=19 // pred_fallthru
          _
        // Predicated region
        $region29: #{tpu_custom_call.1} parent=19 // pred_check
          %p204 = pneg %p100
        $region30: #{tpu_custom_call.1} parent=19 // pred_check_branch
          %206 = sbr.rel (%p204) target = $region32
        $region31: #{tpu_custom_call.1} parent=19 // pred_region
          %s207 = smul.u32 2, %s18
          %p208 = scmp.lt.s32.totalorder %s17, 1
          %s209 = scalar_select %p208, %s17, 1
          %p210 = scmp.lt.s32.totalorder %s207, 1
          %s211 = scalar_select %p210, %s207, 1
          %s212 = smul.addr %s209, 2
          %s213 = sadd.s32 %s211, %s212
          %s214 = sadd.s32 %s213, 8
          %s215 = smul.addr %s214, 4
          %s216 = scalar_lea.vmem %s2, %s215
          %s217 = smul.u32 2, %s18
        $region32: #{tpu_custom_call.1} parent=19 // pred_fallthru
          _
      $region20: #{tpu_custom_call.1} parent=5 // pred_fallthru
        _
      %p218 = scmp.le.s32.totalorder 1, %s10
      %p219 = scmp.lt.s32.totalorder %s10, 3
      %p220 = pnand %p218, %p219
      %p221 = pneg %p220
      // Predicated region
      $region33: #{tpu_custom_call.1} parent=5 // pred_check
        _
      $region34: #{tpu_custom_call.1} parent=5 // pred_check_branch
        %223 = sbr.rel (%p220) target = $region36
      $region35: #{tpu_custom_call.1} parent=5 // pred_region
        %s224 = ssub.s32 %s10, 1
        %s225 = smul.u32 2, %s20
        %p226 = scmp.lt.s32.totalorder %s19, 1
        %s227 = scalar_select %p226, %s19, 1
        %p228 = scmp.lt.s32.totalorder %s225, 1
        %s229 = scalar_select %p228, %s225, 1
        %s230 = smul.addr %s227, 2
        %s231 = sadd.s32 %s229, %s230
        %s232 = smul.addr %s231, 4
        %s233 = scalar_lea.vmem %s0, %s232
        %p234 = pneg %p50
        %p235 = pneg %p47
        %s236 = smul.u32 2, %s20
        %p237 = scmp.lt.s32.totalorder %s19, 1
        %s238 = scalar_select %p237, %s19, 1
        %p239 = scmp.lt.s32.totalorder %s236, 1
        %s240 = scalar_select %p239, %s236, 1
        %s241 = smul.addr %s238, 2
        %s242 = sadd.s32 %s240, %s241
        %s243 = sadd.s32 %s242, 12
        %s244 = smul.addr %s243, 4
        %s245 = scalar_lea.vmem %s1, %s244
        %p246 = pneg %p78
        %p247 = pneg %p75
        %s248 = smul.u32 2, %s20
        %p249 = scmp.lt.s32.totalorder %s19, 1
        %s250 = scalar_select %p249, %s19, 1
        %p251 = scmp.lt.s32.totalorder %s248, 1
        %s252 = scalar_select %p251, %s248, 1
        %s253 = smul.addr %s250, 2
        %s254 = sadd.s32 %s252, %s253
        %s255 = sadd.s32 %s254, 8
        %s256 = smul.addr %s255, 4
        %s257 = scalar_lea.vmem %s2, %s256
        %p258 = pneg %p106
        %p259 = pneg %p103
        %p260 = pneg %p127
        %p261 = pneg %p124
        %p262 = pneg %p155
        %p263 = pneg %p152
        %s264 = sand.u32 %s142, 1
        %s265 = sand.u32 %s142, 1
        %s266 = smul.addr %s265, 32
        %s267 = scalar_lea.vmem [#allocation2], %s266
        %s268 = smul.u32 2, %s20
        %p269 = scmp.lt.s32.totalorder %s19, 1
        %s270 = scalar_select %p269, %s19, 1
        %p271 = scmp.lt.s32.totalorder %s268, 1
        %s272 = scalar_select %p271, %s268, 1
        %s273 = smul.addr %s270, 2
        %s274 = sadd.s32 %s272, %s273
        %s275 = smul.addr %s274, 4
        %s276 = scalar_lea.vmem %s0, %s275
        %s277 = smul.u32 2, %s20
        %s278 = smul.u32 2, %s20
        %p279 = scmp.lt.s32.totalorder %s19, 1
        %s280 = scalar_select %p279, %s19, 1
        %p281 = scmp.lt.s32.totalorder %s278, 1
        %s282 = scalar_select %p281, %s278, 1
        %s283 = smul.addr %s280, 2
        %s284 = sadd.s32 %s282, %s283
        %s285 = sadd.s32 %s284, 12
        %s286 = smul.addr %s285, 4
        %s287 = scalar_lea.vmem %s1, %s286
        %s288 = smul.u32 2, %s20
        %s289 = smul.u32 2, %s20
        %p290 = scmp.lt.s32.totalorder %s19, 1
        %s291 = scalar_select %p290, %s19, 1
        %p292 = scmp.lt.s32.totalorder %s289, 1
        %s293 = scalar_select %p292, %s289, 1
        %s294 = smul.addr %s291, 2
        %s295 = sadd.s32 %s293, %s294
        %s296 = sadd.s32 %s295, 8
        %s297 = smul.addr %s296, 4
        %s298 = scalar_lea.vmem %s2, %s297
        %s299 = smul.u32 2, %s20
        %s300 = smul.u32 2, %s20
        %v301 = vld [vmem:[%s276] sm:$0x77]
        %v302 = vld [vmem:[%s287] sm:$0x77]
        %v303 = vsub.f32 %v301, %v302
        %v304 = vand.u32 2147483647, %v303
        %v305 = vld [vmem:[%s298] sm:$0x77]
        %v306 = vld [vmem:[%s3] sm:$0x7]
        %308 = vset.pattern.permute.xlu0 0
        %309 = vperm.xlu0 %308, %v306
        %v310 = vpop.permute.xlu0 %309
        %v313 = vperm.slane %v304, 0
        %v314 = vperm.slane %v304, 4
        %v317 = vperm.slane %v313, 0
        %v318 = vperm.slane %v314, 0
        %v319 = vmul.f32 %v310, %v317
        %v320 = vmul.f32 %v310, %v318
        %321 = vset.pattern.permute.xlu0 1
        %322 = vperm.xlu0 %321, %v306
        %v323 = vpop.permute.xlu0 %322
        %v325 = vperm.slane %v304, 1
        %v326 = vperm.slane %v304, 5
        %v329 = vperm.slane %v325, 1
        %v330 = vperm.slane %v326, 1
        %v331 = vmul.f32 %v323, %v329
        %v332 = vmul.f32 %v323, %v330
        %v333 = vadd.f32 %v319, %v331
        %v334 = vadd.f32 %v320, %v332
        %335 = vset.pattern.permute.xlu0 2
        %336 = vperm.xlu0 %335, %v306
        %v337 = vpop.permute.xlu0 %336
        %v339 = vperm.slane %v304, 2
        %v340 = vperm.slane %v304, 6
        %v343 = vperm.slane %v339, 2
        %v344 = vperm.slane %v340, 2
        %v345 = vmul.f32 %v337, %v343
        %v346 = vmul.f32 %v337, %v344
        %v347 = vadd.f32 %v333, %v345
        %v348 = vadd.f32 %v334, %v346
        %v349 = vmax.f32 %v347, 0.0
        %v350 = vmax.f32 %v348, 0.0
        %v353 = vrot.slane %v350, 4
        %vm354 = vcmask 1043456
        %v355 = vsel %vm354, %v349, %v353
        %v357 = vadd.f32 %v305, %v355
        %358 = vst [vmem:[%s267] sm:$0x77] %v357
        %s359 = scalar_lea.vmem %s3, 4
        %v360 = vld [vmem:[%s359] sm:$0x7]
        %362 = vset.pattern.permute.xlu0 0
        %363 = vperm.xlu0 %362, %v360
        %v364 = vpop.permute.xlu0 %363
        %v366 = vmul.f32 %v364, %v317
        %v367 = vmul.f32 %v364, %v318
        %368 = vset.pattern.permute.xlu0 1
        %369 = vperm.xlu0 %368, %v360
        %v370 = vpop.permute.xlu0 %369
        %v372 = vmul.f32 %v370, %v329
        %v373 = vmul.f32 %v370, %v330
        %v374 = vadd.f32 %v366, %v372
        %v375 = vadd.f32 %v367, %v373
        %376 = vset.pattern.permute.xlu0 2
        %377 = vperm.xlu0 %376, %v360
        %v378 = vpop.permute.xlu0 %377
        %v380 = vmul.f32 %v378, %v343
        %v381 = vmul.f32 %v378, %v344
        %v382 = vadd.f32 %v374, %v380
        %v383 = vadd.f32 %v375, %v381
        %v384 = vmax.f32 %v382, 0.0
        %v385 = vmax.f32 %v383, 0.0
        %v388 = vrot.slane %v385, 4
        %v389 = vsel %vm354, %v384, %v388
        %v391 = vadd.f32 %v357, %v389
        %s392 = scalar_lea.vmem %s267, 8 [#allocation2]
        %393 = vst [vmem:[%s392] sm:$0x77] %v391
        %s394 = scalar_lea.vmem %s3, 8
        %v395 = vld [vmem:[%s394] sm:$0x7]
        %397 = vset.pattern.permute.xlu0 0
        %398 = vperm.xlu0 %397, %v395
        %v399 = vpop.permute.xlu0 %398
        %v401 = vmul.f32 %v399, %v317
        %v402 = vmul.f32 %v399, %v318
        %403 = vset.pattern.permute.xlu0 1
        %404 = vperm.xlu0 %403, %v395
        %v405 = vpop.permute.xlu0 %404
        %v407 = vmul.f32 %v405, %v329
        %v408 = vmul.f32 %v405, %v330
        %v409 = vadd.f32 %v401, %v407
        %v410 = vadd.f32 %v402, %v408
        %411 = vset.pattern.permute.xlu0 2
        %412 = vperm.xlu0 %411, %v395
        %v413 = vpop.permute.xlu0 %412
        %v415 = vmul.f32 %v413, %v343
        %v416 = vmul.f32 %v413, %v344
        %v417 = vadd.f32 %v409, %v415
        %v418 = vadd.f32 %v410, %v416
        %v419 = vmax.f32 %v417, 0.0
        %v420 = vmax.f32 %v418, 0.0
        %v423 = vrot.slane %v420, 4
        %v424 = vsel %vm354, %v419, %v423
        %v426 = vadd.f32 %v391, %v424
        %s427 = scalar_lea.vmem %s267, 16 [#allocation2]
        %428 = vst [vmem:[%s427] sm:$0x77] %v426
        %s429 = scalar_lea.vmem %s3, 12
        %v430 = vld [vmem:[%s429] sm:$0x7]
        %432 = vset.pattern.permute.xlu0 0
        %433 = vperm.xlu0 %432, %v430
        %v434 = vpop.permute.xlu0 %433
        %v436 = vmul.f32 %v434, %v317
        %v437 = vmul.f32 %v434, %v318
        %438 = vset.pattern.permute.xlu0 1
        %439 = vperm.xlu0 %438, %v430
        %v440 = vpop.permute.xlu0 %439
        %v442 = vmul.f32 %v440, %v329
        %v443 = vmul.f32 %v440, %v330
        %v444 = vadd.f32 %v436, %v442
        %v445 = vadd.f32 %v437, %v443
        %446 = vset.pattern.permute.xlu0 2
        %447 = vperm.xlu0 %446, %v430
        %v448 = vpop.permute.xlu0 %447
        %v450 = vmul.f32 %v448, %v343
        %v451 = vmul.f32 %v448, %v344
        %v452 = vadd.f32 %v444, %v450
        %v453 = vadd.f32 %v445, %v451
        %v454 = vmax.f32 %v452, 0.0
        %v455 = vmax.f32 %v453, 0.0
        %v458 = vrot.slane %v455, 4
        %v459 = vsel %vm354, %v454, %v458
        %v461 = vadd.f32 %v426, %v459
        %s462 = scalar_lea.vmem %s267, 24 [#allocation2]
        %463 = vst [vmem:[%s462] sm:$0x77] %v461
        %s464 = sand.u32 %s142, 1
        %s465 = sand.u32 %s142, 1
        %s466 = smul.addr %s465, 32
        %s467 = scalar_lea.vmem [#allocation2], %s466
        // Predicated region
        $region37: #{tpu_custom_call.1} parent=35 // pred_check
          %p468 = pneg %p152
        $region38: #{tpu_custom_call.1} parent=35 // pred_check_branch
          %470 = sbr.rel (%p468) target = $region40
        $region39: #{tpu_custom_call.1} parent=35 // pred_region
          %s471 = smul.u32 2, %s20
          %s472 = smul.addr %s19, 2
          %s473 = sadd.s32 %s471, %s472
          %s474 = smul.addr %s473, 4
          %s475 = scalar_lea.vmem %s4, %s474
          // Predicated region
          $region41: #{tpu_custom_call.1} parent=39 // pred_check
            _
          $region42: #{tpu_custom_call.1} parent=39 // pred_check_branch
            %477 = sbr.rel (0) target = $region44
          $region43: #{tpu_custom_call.1} parent=39 // pred_region
            // Predicated region
            $region45: #{tpu_custom_call.1} parent=43 // pred_check
              _
            $region46: #{tpu_custom_call.1} parent=43 // pred_check_branch
              %479 = sbr.rel (0) target = $region48
            $region47: #{tpu_custom_call.1} parent=43 // pred_region
              // Predicated region
              $region60: #{tpu_custom_call.1} parent=47 // pred_check
                _
              $region61: #{tpu_custom_call.1} parent=47 // pred_check_branch
                %501 = sbr.rel (0) target = $region63
              $region62: #{tpu_custom_call.1} parent=47 // pred_region
                loop: start=0, step=1, limit=1
                $region64: #{tpu_custom_call.1} parent=62 // loop_pre_header
                  _
                $region65: #{tpu_custom_call.1} parent=62 // loop_header
                  %s503 = sphi 0, %s507
                  %p504 = scmp.ge.s32.totalorder %s503, 1
                  %s508 = sphi %s467, %s467
                  %s509 = sphi %s475, %s475
                $region66: #{tpu_custom_call.1} parent=62 // loop_header_branch
                  %506 = sbr.rel (%p504) target = $region70
                $region67: #{tpu_custom_call.1} parent=62 // loop_body
                  %v510 = vld [vmem:[%s508] sm:$0xff]
                  %511 = vst [vmem:[%s509] sm:$0xff] %v510
                  %v512 = vld [vmem:[%s508 + $0x8] sm:$0xff]
                  %513 = vst [vmem:[%s509 + $0x10] sm:$0xff] %v512
                  %v514 = vld [vmem:[%s508 + $0x10] sm:$0xff]
                  %515 = vst [vmem:[%s509 + $0x20] sm:$0xff] %v514
                  %v516 = vld [vmem:[%s508 + $0x18] sm:$0xff]
                  %517 = vst [vmem:[%s509 + $0x30] sm:$0xff] %v516
                $region68: #{tpu_custom_call.1} parent=62 // loop_footer
                  %s507 = sadd.s32 1, %s503
                $region69: #{tpu_custom_call.1} parent=62 // loop_footer_branch
                  %502 = sbr.rel target = $region65
                $region70: #{tpu_custom_call.1} parent=62 // loop_exit
                  _
              $region63: #{tpu_custom_call.1} parent=47 // pred_fallthru
                _
              // Predicated region
              $region71: #{tpu_custom_call.1} parent=47 // pred_check
                _
              $region72: #{tpu_custom_call.1} parent=47 // pred_check_branch
                %519 = sbr.rel target = $region74
              $region73: #{tpu_custom_call.1} parent=47 // pred_region
                _
              $region74: #{tpu_custom_call.1} parent=47 // pred_fallthru
                _
            $region48: #{tpu_custom_call.1} parent=43 // pred_fallthru
              _
            // Predicated region
            $region49: #{tpu_custom_call.1} parent=43 // pred_check
              _
            $region50: #{tpu_custom_call.1} parent=43 // pred_check_branch
              %481 = sbr.rel target = $region52
            $region51: #{tpu_custom_call.1} parent=43 // pred_region
              %s483 = ssub.s32 256, 1
              loop: start=0, step=1, limit=1
              $region53: #{tpu_custom_call.1} parent=51 // loop_pre_header
                _
              $region54: #{tpu_custom_call.1} parent=51 // loop_header
                %s485 = sphi 0, %s489
                %p486 = scmp.ge.s32.totalorder %s485, 1
                %s490 = sphi %s467, %s467
                %s491 = sphi %s475, %s475
              $region55: #{tpu_custom_call.1} parent=51 // loop_header_branch
                %488 = sbr.rel (%p486) target = $region59
              $region56: #{tpu_custom_call.1} parent=51 // loop_body
                %v492 = vld [vmem:[%s490] sm:%s483]
                %493 = vst [vmem:[%s491] sm:%s483] %v492
                %v494 = vld [vmem:[%s490 + $0x8] sm:%s483]
                %495 = vst [vmem:[%s491 + $0x10] sm:%s483] %v494
                %v496 = vld [vmem:[%s490 + $0x10] sm:%s483]
                %497 = vst [vmem:[%s491 + $0x20] sm:%s483] %v496
                %v498 = vld [vmem:[%s490 + $0x18] sm:%s483]
                %499 = vst [vmem:[%s491 + $0x30] sm:%s483] %v498
              $region57: #{tpu_custom_call.1} parent=51 // loop_footer
                %s489 = sadd.s32 1, %s485
              $region58: #{tpu_custom_call.1} parent=51 // loop_footer_branch
                %484 = sbr.rel target = $region54
              $region59: #{tpu_custom_call.1} parent=51 // loop_exit
                _
            $region52: #{tpu_custom_call.1} parent=43 // pred_fallthru
              _
          $region44: #{tpu_custom_call.1} parent=39 // pred_fallthru
            _
          %520 = vnop
        $region40: #{tpu_custom_call.1} parent=35 // pred_fallthru
          _
      $region36: #{tpu_custom_call.1} parent=5 // pred_fallthru
        _
      %p521 = scmp.le.s32.totalorder 2, %s10
      // Predicated region
      $region75: #{tpu_custom_call.1} parent=5 // pred_check
        %p522 = pneg %p521
      $region76: #{tpu_custom_call.1} parent=5 // pred_check_branch
        %524 = sbr.rel (%p522) target = $region78
      $region77: #{tpu_custom_call.1} parent=5 // pred_region
        %s525 = ssub.s32 %s10, 2
        // Predicated region
        $region79: #{tpu_custom_call.1} parent=77 // pred_check
          %p526 = pneg %p158
        $region80: #{tpu_custom_call.1} parent=77 // pred_check_branch
          %528 = sbr.rel (%p526) target = $region82
        $region81: #{tpu_custom_call.1} parent=77 // pred_region
          %s529 = sand.u32 %s143, 1
          %s530 = sand.u32 %s143, 1
          %s531 = smul.addr %s530, 32
          %s532 = scalar_lea.vmem [#allocation2], %s531
        $region82: #{tpu_custom_call.1} parent=77 // pred_fallthru
          _
      $region78: #{tpu_custom_call.1} parent=5 // pred_fallthru
        _
    $region6: #{tpu_custom_call.1} parent=1 // loop_footer
      %s14 = sadd.s32 1, %s10
    $region7: #{tpu_custom_call.1} parent=1 // loop_footer_branch
      %9 = sbr.rel target = $region3
    $region8: #{tpu_custom_call.1} parent=1 // loop_exit
      _

</llo_original>
